<compile_context>
chip_gen: v7x
topology: tpu7x:2x2x1
jax: 0.10.0
libtpu: 0.0.40
codegen_flags: <defaults>
</compile_context>

<pallas_src>
import functools
import math

import jax
import jax.numpy as jnp
from jax import lax
from jax.experimental import pallas as pl
from jax.experimental.pallas import tpu as pltpu


# ---------------------------------------------------------------------------
# Kernels
# ---------------------------------------------------------------------------

def _clipnorm_seg_kernel(x_ref, o_ref, *, max_norm, D, G, chunk):
    """Lane-dense path: x_ref is [TR, W] with G subspaces of width D packed per row."""
    TR, W = x_ref.shape

    # 0/1 segment matrices generated in-kernel (no input DMA, no double-buffering).
    w_idx = lax.broadcasted_iota(jnp.int32, (W, G), 0)
    g_idx = lax.broadcasted_iota(jnp.int32, (W, G), 1)
    seg = ((w_idx >= g_idx * D) & (w_idx < (g_idx + 1) * D)).astype(jnp.float32)   # [W,G]
    w_t = lax.broadcasted_iota(jnp.int32, (G, W), 1)
    g_t = lax.broadcasted_iota(jnp.int32, (G, W), 0)
    segt = ((w_t >= g_t * D) & (w_t < (g_t + 1) * D)).astype(jnp.float32)          # [G,W]

    def do_chunk(r0, rows):
        x = x_ref[pl.ds(r0, rows), :].astype(jnp.float32)                          # [rows,W]
        # Segmented sum of squares on the (idle) MXU; HIGHEST keeps it ~f32-accurate.
        sq = jnp.dot(x * x, seg, preferred_element_type=jnp.float32,
                     precision=lax.Precision.HIGHEST)                              # [rows,G]
        # sq == 0 -> rsqrt = +inf -> min(inf, 1) = 1, matching the reference.
        scale = jnp.minimum(max_norm * lax.rsqrt(sq), 1.0)                         # [rows,G]
        # Broadcast each subspace's scale back to its D lanes (exact: 0/1 matrix).
        scale_w = jnp.dot(scale, segt, preferred_element_type=jnp.float32,
                          precision=lax.Precision.HIGHEST)                         # [rows,W]
        o_ref[pl.ds(r0, rows), :] = (x * scale_w).astype(o_ref.dtype)

    c = min(chunk, TR)
    n_full = TR // c
    rem = TR - n_full * c
    if n_full == 1:
        do_chunk(0, c)
    elif n_full > 1:
        def body(i, carry):
            do_chunk(pl.multiple_of(i * c, c), c)
            return carry
        lax.fori_loop(0, n_full, body, 0)
    if rem:
        do_chunk(n_full * c, rem)   # static tail


def _clipnorm_rowsum_kernel(x_ref, o_ref, *, max_norm, chunk):
    """Fallback path (G == 1): the norm axis itself is the lane axis of the block."""
    TR, W = x_ref.shape

    def do_chunk(r0, rows):
        x = x_ref[pl.ds(r0, rows), :].astype(jnp.float32)                          # [rows,W]
        sq = jnp.sum(x * x, axis=-1, keepdims=True)                                # [rows,1]
        scale = jnp.minimum(max_norm * lax.rsqrt(sq), 1.0)
        o_ref[pl.ds(r0, rows), :] = (x * scale).astype(o_ref.dtype)

    c = min(chunk, TR)
    n_full = TR // c
    rem = TR - n_full * c
    if n_full == 1:
        do_chunk(0, c)
    elif n_full > 1:
        def body(i, carry):
            do_chunk(pl.multiple_of(i * c, c), c)
            return carry
        lax.fori_loop(0, n_full, body, 0)
    if rem:
        do_chunk(n_full * c, rem)


# ---------------------------------------------------------------------------
# Hardware / tiling heuristics
# ---------------------------------------------------------------------------

def _hw_info():
    """(vmem_capacity_bytes, num_tensorcores) -- defensive against API differences."""
    vmem_cap = 128 << 20
    num_cores = 1
    try:
        info = pltpu.get_tpu_info()
        for name in ("vmem_capacity_bytes", "vmem_bytes", "vmem_size_bytes"):
            v = getattr(info, name, None)
            if v:
                vmem_cap = int(v)
                break
        cores = None
        for name in ("num_cores", "tensorcore_count", "num_tensorcores",
                     "cores_per_chip"):
            c = getattr(info, name, None)
            if c:
                cores = int(c)
                break
        # Heuristic: 64 MiB VMEM per TC => v7x-class chip with 2 TensorCores.
        num_cores = cores if cores else (2 if vmem_cap <= (64 << 20) else 1)
    except Exception:
        pass
    return vmem_cap, num_cores


def _choose_pack(R_total, D, max_lanes=4096):
    """Pick (G, W): G subspaces packed per row so W = G*D is a multiple of 128."""
    if D % 128 == 0 or R_total <= 1:
        return 1, D
    g = (D * 128) // math.gcd(D, 128) // D     # lcm(D,128)/D
    if g * D <= max_lanes:
        return g, g * D
    # Very large, awkward D: settle for a >=256-lane (masked-tail) width.
    g = max(1, -(-256 // D))
    return g, g * D


def _plan_tiling(R, W, itemsize, block_bytes, num_cores, vmem_cap, G):
    """Returns (rows_per_block, compute_chunk_rows, vmem_limit_bytes)."""
    sublane = max(8, 32 // max(itemsize, 1))        # 8 f32, 16 bf16, 32 int8/fp8
    bytes_per_row = max(W * itemsize, 1)

    # Compute-chunk rows: keep the f32 temporaries (x, x^2, scale_w) around ~1 MiB
    # total so they live near the vreg file regardless of how big the DMA block is.
    chunk = max(sublane, ((256 * 1024) // (W * 4)) // sublane * sublane)

    if block_bytes is None:
        # v7x (64 MiB VMEM/TC, 3.2 TB/s) -> 4 MiB blocks; v5e/v6e (128 MiB) -> 6 MiB.
        block_bytes = (4 << 20) if vmem_cap <= (64 << 20) else (6 << 20)

    cap = (vmem_cap * 3) // 4

    def need(tr):
        return (4 * tr * bytes_per_row             # double-buffered in + out blocks
                + 4 * min(chunk, tr) * W * 4       # f32 chunk temporaries
                + 2 * W * max(G, 1) * 4            # seg / segt
                + (1 << 20))                       # compiler slack

    rows = max(sublane, (block_bytes // bytes_per_row) // sublane * sublane)
    while rows > sublane and need(rows) > cap:
        rows = max(sublane, (rows // 2) // sublane * sublane)
    if need(rows) > cap:
        # TODO(synk): add a D-tiled (reduction-grid / two-pass) variant for norm axes so
        # large that even a minimal 8-row block does not fit the VMEM budget.
        raise NotImplementedError(
            f"ClipNorm: norm axis too large for a single VMEM block (W={W}).")

    if rows >= R:
        # Whole slab fits in one budget-sized block.
        if num_cores <= 1 or R < 4 * num_cores * sublane:
            rows = R                                # no pointless serial split on 1-TC chips
        else:
            # Multi-TC (v7x): several grid steps per core so DMA prefetch/writeback can
            # overlap compute, but keep blocks >= ~1 MiB.
            floor_rows = max(sublane, ((1 << 20) // bytes_per_row) // sublane * sublane)
            steps = 3 * num_cores
            tr = max(floor_rows, pl.cdiv(R, steps))
            rows = min(R, ((tr + sublane - 1) // sublane) * sublane)

    vmem_limit = int(min(cap, max(need(rows) + (4 << 20), 32 << 20)))
    vmem_limit = min(vmem_limit, vmem_cap)
    return int(rows), int(chunk), int(vmem_limit)


# ---------------------------------------------------------------------------
# pallas_call wrapper
# ---------------------------------------------------------------------------

def _clipnorm_2d(x2d, max_norm, *, D, G, block_bytes, donate_input):
    """x2d: [R, W] with W = G*D; clips each D-wide segment of every row."""
    R, W = x2d.shape
    itemsize = x2d.dtype.itemsize
    vmem_cap, num_cores = _hw_info()
    TR, chunk, vmem_limit = _plan_tiling(R, W, itemsize, block_bytes,
                                         num_cores, vmem_cap, G)
    grid = (pl.cdiv(R, TR),)

    if G > 1:
        kernel = functools.partial(_clipnorm_seg_kernel, max_norm=float(max_norm),
                                   D=D, G=G, chunk=chunk)
        flops = R * (3 * W + 4 * W * G)
    else:
        kernel = functools.partial(_clipnorm_rowsum_kernel, max_norm=float(max_norm),
                                   chunk=chunk)
        flops = 3 * R * W
    transcendentals = R * max(G, 1)
    bytes_accessed = 2 * R * W * itemsize

    return pl.pallas_call(
        kernel,
        out_shape=jax.ShapeDtypeStruct((R, W), x2d.dtype),
        grid_spec=pltpu.PrefetchScalarGridSpec(
            num_scalar_prefetch=0,
            grid=grid,
            in_specs=[pl.BlockSpec((TR, W), lambda i: (i, 0))],
            out_specs=pl.BlockSpec((TR, W), lambda i: (i, 0)),
        ),
        compiler_params=pltpu.CompilerParams(
            dimension_semantics=("parallel",),
            vmem_limit_bytes=int(vmem_limit)),
        cost_estimate=pl.CostEstimate(
            flops=int(flops),
            transcendentals=int(transcendentals),
            bytes_accessed=int(bytes_accessed)),
        input_output_aliases=({0: 0} if donate_input else {}),
    )(x2d)


def clip_norm(x, max_norm=15, dimensions_per_space=None, *,
              block_bytes=None, donate_input=False):
    """JAX/Pallas equivalent of ClipNorm.forward."""
    orig_shape = x.shape
    F = int(orig_shape[-1])
    if dimensions_per_space:
        assert F % dimensions_per_space == 0
        D = int(dimensions_per_space)
    else:
        D = F

    total = 1
    for s in orig_shape:
        total *= int(s)
    if total == 0:
        return x

    R_total = total // D
    G, W = _choose_pack(R_total, D)

    # Row-major flattening keeps each D-wide subspace contiguous, so packing G
    # consecutive subspaces per lane-row is a pure reshape.  If R_total is not a
    # multiple of G, pad with zeros (scale of a zero row is 1 => padded outputs are 0)
    # and slice the pad off afterwards -- never fall back to narrow masked stores.
    R_pad = pl.cdiv(R_total, G) * G
    flat = x.reshape(-1)
    pad_elems = (R_pad - R_total) * D
    if pad_elems:
        flat = jnp.pad(flat, (0, pad_elems))
    x2d = flat.reshape(R_pad // G, W)

    out2d = _clipnorm_2d(x2d, float(max_norm), D=D, G=G,
                         block_bytes=block_bytes, donate_input=donate_input)

    out_flat = out2d.reshape(-1)
    if pad_elems:
        out_flat = out_flat[:total]
    return out_flat.reshape(orig_shape)


# ---------------------------------------------------------------------------
# Pure-JAX reference (mirrors the PyTorch forward)
# ---------------------------------------------------------------------------

def clip_norm_ref(x, max_norm=15, dimensions_per_space=None):
    orig_shape = x.shape
    if dimensions_per_space:
        feat = orig_shape[-1]
        rs = x.reshape(*orig_shape[:-1], feat // dimensions_per_space,
                       dimensions_per_space)
    else:
        rs = x
    l2 = jnp.sqrt(jnp.sum(rs.astype(jnp.float32) ** 2, axis=-1, keepdims=True))
    scale = jnp.minimum(max_norm / l2, jnp.ones_like(l2))
    out = (rs * scale).astype(x.dtype)
    if dimensions_per_space:
        out = out.reshape(orig_shape)
    return out


# ---------------------------------------------------------------------------
# Smoke test
# ---------------------------------------------------------------------------

if __name__ == "__main__":
    key = jax.random.PRNGKey(0)
    k1, k2, k3, k4, k5, k6 = jax.random.split(key, 6)

    # With Precision.HIGHEST on both MXU dots the kernel is near-f32-exact.
    ATOL, RTOL = 1e-4, 1e-4

    # Case 1: NCHW-like input, norm over last dim (16); packed 8 subspaces -> 128 lanes.
    x1 = jax.random.normal(k1, (2, 4, 16, 16), dtype=jnp.float32) * 10.0
    y1 = clip_norm(x1, max_norm=15, dimensions_per_space=None)
    jax.block_until_ready(y1)
    y1_ref = clip_norm_ref(x1, max_norm=15, dimensions_per_space=None)
    assert y1.shape == x1.shape and y1.dtype == x1.dtype
    assert jnp.allclose(y1, y1_ref, atol=ATOL, rtol=RTOL), "case 1 mismatch"

    # Case 2: (batch, seq, hidden) with dimensions_per_space=8; 16 subspaces -> 128 lanes.
    x2 = jax.random.normal(k2, (2, 8, 32), dtype=jnp.float32) * 20.0
    y2 = clip_norm(x2, max_norm=15, dimensions_per_space=8)
    jax.block_until_ready(y2)
    y2_ref = clip_norm_ref(x2, max_norm=15, dimensions_per_space=8)
    assert y2.shape == x2.shape and y2.dtype == x2.dtype
    assert jnp.allclose(y2, y2_ref, atol=ATOL, rtol=RTOL), "case 2 mismatch"

    # Case 3: already lane-aligned last dim (256) -> row-sum fallback path, no packing.
    x3 = jax.random.normal(k3, (4, 256), dtype=jnp.float32) * 3.0
    y3 = clip_norm(x3, max_norm=15, dimensions_per_space=None)
    jax.block_until_ready(y3)
    y3_ref = clip_norm_ref(x3, max_norm=15, dimensions_per_space=None)
    assert jnp.allclose(y3, y3_ref, atol=ATOL, rtol=RTOL), "case 3 mismatch"

    # Case 4: force a multi-step grid with a short (masked) last block via a tiny
    # block-byte budget, exercising the pl.cdiv boundary handling.
    x4 = jax.random.normal(k4, (2, 100, 16), dtype=jnp.float32) * 10.0
    y4 = clip_norm(x4, max_norm=15, dimensions_per_space=None, block_bytes=4096)
    jax.block_until_ready(y4)
    y4_ref = clip_norm_ref(x4, max_norm=15, dimensions_per_space=None)
    assert jnp.allclose(y4, y4_ref, atol=ATOL, rtol=RTOL), "case 4 mismatch"

    # Case 5: bf16 input (sublane packing 16), dimensions_per_space=8.
    x5 = (jax.random.normal(k5, (2, 8, 32), dtype=jnp.float32) * 20.0).astype(jnp.bfloat16)
    y5 = clip_norm(x5, max_norm=15, dimensions_per_space=8)
    jax.block_until_ready(y5)
    y5_ref = clip_norm_ref(x5, max_norm=15, dimensions_per_space=8)
    assert y5.dtype == jnp.bfloat16
    assert jnp.allclose(y5.astype(jnp.float32), y5_ref.astype(jnp.float32),
                        atol=0.1, rtol=0.05), "case 5 mismatch"

    # Case 6: ragged subspace count (15 subspaces, G=8) -> exercises the pad/slice path.
    x6 = jax.random.normal(k6, (3, 5, 16), dtype=jnp.float32) * 10.0
    y6 = clip_norm(x6, max_norm=15, dimensions_per_space=None)
    jax.block_until_ready(y6)
    y6_ref = clip_norm_ref(x6, max_norm=15, dimensions_per_space=None)
    assert jnp.allclose(y6, y6_ref, atol=ATOL, rtol=RTOL), "case 6 mismatch"

    print("KERNEL_OK")
</pallas_src>

<mosaic_0001>
module attributes {stable_mosaic.version = 11 : i64} {
  func.func @_clipnorm_seg_kernel(%arg0: i32, %arg1: memref<16x128xf32, #tpu.memory_space<vmem>>, %arg2: memref<16x128xf32, #tpu.memory_space<vmem>>) attributes {dimension_semantics = [#tpu.dimension_semantics<parallel>], iteration_bounds = array<i64: 1>, scalar_prefetch = 0 : i64, scratch_operands = 0 : i64, tpu.core_type = #tpu.core_type<tc>, window_params = [{transform_indices = @transform_0, window_bounds = array<i64: 16, 128>}, {transform_indices = @transform_1, window_bounds = array<i64: 16, 128>}]} {
    %0 = tpu.iota {dimensions = array<i32: 0>} : vector<128x8xi32>
    %1 = tpu.iota {dimensions = array<i32: 1>} : vector<128x8xi32>
    %c16_i32 = arith.constant 16 : i32
    %2 = vector.broadcast %c16_i32 : i32 to vector<128x8xi32>
    %3 = arith.muli %1, %2 : vector<128x8xi32>
    %4 = arith.cmpi sge, %0, %3 : vector<128x8xi32>
    %c1_i32 = arith.constant 1 : i32
    %5 = vector.broadcast %c1_i32 : i32 to vector<128x8xi32>
    %6 = arith.addi %1, %5 : vector<128x8xi32>
    %c16_i32_0 = arith.constant 16 : i32
    %7 = vector.broadcast %c16_i32_0 : i32 to vector<128x8xi32>
    %8 = arith.muli %6, %7 : vector<128x8xi32>
    %9 = arith.cmpi slt, %0, %8 : vector<128x8xi32>
    %10 = arith.andi %4, %9 : vector<128x8xi1>
    %11 = arith.extui %10 : vector<128x8xi1> to vector<128x8xi32>
    %12 = arith.sitofp %11 : vector<128x8xi32> to vector<128x8xf32>
    %13 = tpu.iota {dimensions = array<i32: 1>} : vector<8x128xi32>
    %14 = tpu.iota {dimensions = array<i32: 0>} : vector<8x128xi32>
    %c16_i32_1 = arith.constant 16 : i32
    %15 = vector.broadcast %c16_i32_1 : i32 to vector<8x128xi32>
    %16 = arith.muli %14, %15 : vector<8x128xi32>
    %17 = arith.cmpi sge, %13, %16 : vector<8x128xi32>
    %c1_i32_2 = arith.constant 1 : i32
    %18 = vector.broadcast %c1_i32_2 : i32 to vector<8x128xi32>
    %19 = arith.addi %14, %18 : vector<8x128xi32>
    %c16_i32_3 = arith.constant 16 : i32
    %20 = vector.broadcast %c16_i32_3 : i32 to vector<8x128xi32>
    %21 = arith.muli %19, %20 : vector<8x128xi32>
    %22 = arith.cmpi slt, %13, %21 : vector<8x128xi32>
    %23 = arith.andi %17, %22 : vector<8x128xi1>
    %24 = arith.extui %23 : vector<8x128xi1> to vector<8x128xi32>
    %25 = arith.sitofp %24 : vector<8x128xi32> to vector<8x128xf32>
    %c0 = arith.constant 0 : index
    %c0_4 = arith.constant 0 : index
    %26 = vector.load %arg1[%c0, %c0_4] : memref<16x128xf32, #tpu.memory_space<vmem>>, vector<16x128xf32>
    %27 = arith.mulf %26, %26 : vector<16x128xf32>
    %cst = arith.constant dense<0.000000e+00> : vector<16x8xf32>
    %28 = tpu.matmul %27, %12, %cst {dimension_numbers = #tpu.dot_dimension_numbers<[1], [0], [0], [1], [0, 0, 1, 1], [], []>, precision = #tpu.contract_precision<fp32>} : vector<16x128xf32>, vector<128x8xf32>, vector<16x8xf32> -> vector<16x8xf32>
    %29 = math.rsqrt %28 : vector<16x8xf32>
    %cst_5 = arith.constant 1.500000e+01 : f32
    %30 = vector.broadcast %cst_5 : f32 to vector<16x8xf32>
    %31 = arith.mulf %30, %29 : vector<16x8xf32>
    %cst_6 = arith.constant 1.000000e+00 : f32
    %32 = vector.broadcast %cst_6 : f32 to vector<16x8xf32>
    %33 = arith.minimumf %31, %32 : vector<16x8xf32>
    %cst_7 = arith.constant dense<0.000000e+00> : vector<16x128xf32>
    %34 = tpu.matmul %33, %25, %cst_7 {dimension_numbers = #tpu.dot_dimension_numbers<[1], [0], [0], [1], [0, 0, 1, 1], [], []>, precision = #tpu.contract_precision<fp32>} : vector<16x8xf32>, vector<8x128xf32>, vector<16x128xf32> -> vector<16x128xf32>
    %35 = arith.mulf %26, %34 : vector<16x128xf32>
    %c0_8 = arith.constant 0 : index
    %c0_9 = arith.constant 0 : index
    %36 = vector.load %arg2[%c0_8, %c0_9] : memref<16x128xf32, #tpu.memory_space<vmem>>, vector<16x128xf32>
    tpu.vector_store %arg2[%c0_8, %c0_9], %35 {strides = array<i32>} : memref<16x128xf32, #tpu.memory_space<vmem>>, vector<16x128xf32>,
    return
  }
  func.func @transform_0(%arg0: i32) -> (i32, i32) {
    %c0_i32 = arith.constant 0 : i32
    %c0_i32_0 = arith.constant 0 : i32
    return %arg0, %c0_i32 : i32, i32
  }
  func.func @transform_1(%arg0: i32) -> (i32, i32) {
    %c0_i32 = arith.constant 0 : i32
    %c0_i32_0 = arith.constant 0 : i32
    return %arg0, %c0_i32 : i32, i32
  }
}

</mosaic_0001>

<llo_original>
// kernel: tpu_custom_call.1
$region0: #{tpu_custom_call.1}
  #allocation0 [shape = 'u32[]', space=smem, size = 0x4, offset = 0x4, fixed_abs, tag = 'smem constant byte address 0x4 - core index']
  #allocation1 [shape = 'u32[144,128]{1,0:T(1,128)}', space=vmem, size = 0x12000, scoped, tag = 'internal scratch']
  %s0 = inlined_call_operand.hbm [shape: f32[16,128], index: 0, kind: input, shape index: {}]
  %s1 = inlined_call_operand.hbm [shape: f32[16,128], index: 1, kind: output, shape index: {}]
  %s2 = sld [smem:[#allocation0]]
  $region18: #{tpu_custom_call.1} parent=0
    _
  %s4 = ssub.s32 1, %s2
  %s5 = scalar_select 0, %s4, %s2
  $region1: #{tpu_custom_call.1} parent=0
    #allocation2 [shape = 'u8[8192]{0}', space=vmem, size = 0x2000, scoped, tag = 'input window, operand 0, single buffered']
    #allocation3 [shape = 's32[1]{0}', space=sflag, size = 0x4, scoped, tag = 'scoped memory for tpu_custom_call.1']
    #allocation4 [shape = 's32[1]{0}', space=sflag, size = 0x4, scoped, tag = 'scoped memory for tpu_custom_call.1']
    #allocation5 [shape = 'u8[8192]{0}', space=vmem, size = 0x2000, scoped, tag = 'output window, operand 0, single buffered']
    %6 = vsyncpa [#allocation3], 0
    %7 = vsyncpa [#allocation4], 0
    // Predicated region
    $region2: #{tpu_custom_call.1} parent=1 // pred_check
      _
    $region3: #{tpu_custom_call.1} parent=1 // pred_check_branch
      %9 = sbr.rel (0) target = $region5
    $region4: #{tpu_custom_call.1} parent=1 // pred_region
      %s11 = ssub.s32 256, 256
      %12 = vsyncadd [#allocation3], %s11
      %s13 = sshll.u32 [#allocation2], 4
      %s14 = int_to_ptr.vmem [resolvable:$true] %s13
      %19 = dma.hbm_to_vmem [thread:$0]  %s0, 256, %s14, [#allocation3], 128, 128, 8
    $region5: #{tpu_custom_call.1} parent=1 // pred_fallthru
      _
    // Predicated region
    $region6: #{tpu_custom_call.1} parent=1 // pred_check
      _
    $region7: #{tpu_custom_call.1} parent=1 // pred_check_branch
      %21 = sbr.rel (0) target = $region9
    $region8: #{tpu_custom_call.1} parent=1 // pred_region
      %22 = dma.done [#allocation3], 256
    $region9: #{tpu_custom_call.1} parent=1 // pred_fallthru
      _
    %v23 = vlaneseq
    %v24 = vshrl.u32 %v23, 7
    %v25 = vadd.s32 %v24, 8
    %v26 = vadd.s32 %v24, 16
    %v27 = vadd.s32 %v24, 24
    %v28 = vadd.s32 %v24, 32
    %v29 = vadd.s32 %v24, 40
    %v30 = vadd.s32 %v24, 48
    %v31 = vadd.s32 %v24, 56
    %v32 = vadd.s32 %v24, 64
    %v33 = vadd.s32 %v24, 72
    %v34 = vadd.s32 %v24, 80
    %v35 = vadd.s32 %v24, 88
    %v36 = vadd.s32 %v24, 96
    %v37 = vadd.s32 %v24, 104
    %v38 = vadd.s32 %v24, 112
    %v39 = vadd.s32 %v24, 120
    %v40 = vlaneseq
    %v41 = vand.u32 %v40, 127
    %v42 = vmul.u32 %v41, 16
    %vm43 = vcmp.ge.s32.totalorder %v24, %v42
    %vm44 = vcmp.ge.s32.totalorder %v25, %v42
    %vm45 = vcmp.ge.s32.totalorder %v26, %v42
    %vm46 = vcmp.ge.s32.totalorder %v27, %v42
    %vm47 = vcmp.ge.s32.totalorder %v28, %v42
    %vm48 = vcmp.ge.s32.totalorder %v29, %v42
    %vm49 = vcmp.ge.s32.totalorder %v30, %v42
    %vm50 = vcmp.ge.s32.totalorder %v31, %v42
    %vm51 = vcmp.ge.s32.totalorder %v32, %v42
    %vm52 = vcmp.ge.s32.totalorder %v33, %v42
    %vm53 = vcmp.ge.s32.totalorder %v34, %v42
    %vm54 = vcmp.ge.s32.totalorder %v35, %v42
    %vm55 = vcmp.ge.s32.totalorder %v36, %v42
    %vm56 = vcmp.ge.s32.totalorder %v37, %v42
    %vm57 = vcmp.ge.s32.totalorder %v38, %v42
    %vm58 = vcmp.ge.s32.totalorder %v39, %v42
    %v59 = vadd.s32 %v41, 1
    %v60 = vmul.u32 %v59, 16
    %vm61 = vcmp.lt.s32.totalorder %v24, %v60
    %vm62 = vcmp.lt.s32.totalorder %v25, %v60
    %vm63 = vcmp.lt.s32.totalorder %v26, %v60
    %vm64 = vcmp.lt.s32.totalorder %v27, %v60
    %vm65 = vcmp.lt.s32.totalorder %v28, %v60
    %vm66 = vcmp.lt.s32.totalorder %v29, %v60
    %vm67 = vcmp.lt.s32.totalorder %v30, %v60
    %vm68 = vcmp.lt.s32.totalorder %v31, %v60
    %vm69 = vcmp.lt.s32.totalorder %v32, %v60
    %vm70 = vcmp.lt.s32.totalorder %v33, %v60
    %vm71 = vcmp.lt.s32.totalorder %v34, %v60
    %vm72 = vcmp.lt.s32.totalorder %v35, %v60
    %vm73 = vcmp.lt.s32.totalorder %v36, %v60
    %vm74 = vcmp.lt.s32.totalorder %v37, %v60
    %vm75 = vcmp.lt.s32.totalorder %v38, %v60
    %vm76 = vcmp.lt.s32.totalorder %v39, %v60
    %vm77 = vmand %vm43, %vm61
    %vm78 = vmand %vm44, %vm62
    %vm79 = vmand %vm45, %vm63
    %vm80 = vmand %vm46, %vm64
    %vm81 = vmand %vm47, %vm65
    %vm82 = vmand %vm48, %vm66
    %vm83 = vmand %vm49, %vm67
    %vm84 = vmand %vm50, %vm68
    %vm85 = vmand %vm51, %vm69
    %vm86 = vmand %vm52, %vm70
    %vm87 = vmand %vm53, %vm71
    %vm88 = vmand %vm54, %vm72
    %vm89 = vmand %vm55, %vm73
    %vm90 = vmand %vm56, %vm74
    %vm91 = vmand %vm57, %vm75
    %vm92 = vmand %vm58, %vm76
    %v93 = vsel %vm77, 1, 0
    %v94 = vsel %vm78, 1, 0
    %v95 = vsel %vm79, 1, 0
    %v96 = vsel %vm80, 1, 0
    %v97 = vsel %vm81, 1, 0
    %v98 = vsel %vm82, 1, 0
    %v99 = vsel %vm83, 1, 0
    %v100 = vsel %vm84, 1, 0
    %v101 = vsel %vm85, 1, 0
    %v102 = vsel %vm86, 1, 0
    %v103 = vsel %vm87, 1, 0
    %v104 = vsel %vm88, 1, 0
    %v105 = vsel %vm89, 1, 0
    %v106 = vsel %vm90, 1, 0
    %v107 = vsel %vm91, 1, 0
    %v108 = vsel %vm92, 1, 0
    %v109 = vcvt.s32.f32 %v93
    %v110 = vcvt.s32.f32 %v94
    %v111 = vcvt.s32.f32 %v95
    %v112 = vcvt.s32.f32 %v96
    %v113 = vcvt.s32.f32 %v97
    %v114 = vcvt.s32.f32 %v98
    %v115 = vcvt.s32.f32 %v99
    %v116 = vcvt.s32.f32 %v100
    %v117 = vcvt.s32.f32 %v101
    %v118 = vcvt.s32.f32 %v102
    %v119 = vcvt.s32.f32 %v103
    %v120 = vcvt.s32.f32 %v104
    %v121 = vcvt.s32.f32 %v105
    %v122 = vcvt.s32.f32 %v106
    %v123 = vcvt.s32.f32 %v107
    %v124 = vcvt.s32.f32 %v108
    %v125 = vmul.u32 %v24, 16
    %vm126 = vcmp.ge.s32.totalorder %v41, %v125
    %v127 = vadd.s32 %v24, 1
    %v128 = vmul.u32 %v127, 16
    %vm129 = vcmp.lt.s32.totalorder %v41, %v128
    %vm130 = vmand %vm126, %vm129
    %v131 = vsel %vm130, 1, 0
    %v132 = vcvt.s32.f32 %v131
    %v133 = vld [vmem:[#allocation2] sm:$0xff]
    %v134 = vld [vmem:[#allocation2 + $0x8] sm:$0xff]
    %v135 = vmul.f32 %v133, %v133
    %v136 = vmul.f32 %v134, %v134
    %137 = vmatprep.subr.mxu0 0.0
    %v138 = vand.u32 %v109, 4294901760
    %139 = vmatpush1.msra.mxu0 %v138
    %140 = vmatprep.subr.mxu0 0.0
    %v141 = vand.u32 %v110, 4294901760
    %142 = vmatpush1.msra.mxu0 %v141
    %143 = vmatprep.subr.mxu0 0.0
    %v144 = vand.u32 %v111, 4294901760
    %145 = vmatpush1.msra.mxu0 %v144
    %146 = vmatprep.subr.mxu0 0.0
    %v147 = vand.u32 %v112, 4294901760
    %148 = vmatpush1.msra.mxu0 %v147
    %149 = vmatprep.subr.mxu0 0.0
    %v150 = vand.u32 %v113, 4294901760
    %151 = vmatpush1.msra.mxu0 %v150
    %152 = vmatprep.subr.mxu0 0.0
    %v153 = vand.u32 %v114, 4294901760
    %154 = vmatpush1.msra.mxu0 %v153
    %155 = vmatprep.subr.mxu0 0.0
    %v156 = vand.u32 %v115, 4294901760
    %157 = vmatpush1.msra.mxu0 %v156
    %158 = vmatprep.subr.mxu0 0.0
    %v159 = vand.u32 %v116, 4294901760
    %160 = vmatpush1.msra.mxu0 %v159
    %161 = vmatprep.subr.mxu0 0.0
    %v162 = vand.u32 %v117, 4294901760
    %163 = vmatpush1.msra.mxu0 %v162
    %164 = vmatprep.subr.mxu0 0.0
    %v165 = vand.u32 %v118, 4294901760
    %166 = vmatpush1.msra.mxu0 %v165
    %167 = vmatprep.subr.mxu0 0.0
    %v168 = vand.u32 %v119, 4294901760
    %169 = vmatpush1.msra.mxu0 %v168
    %170 = vmatprep.subr.mxu0 0.0
    %v171 = vand.u32 %v120, 4294901760
    %172 = vmatpush1.msra.mxu0 %v171
    %173 = vmatprep.subr.mxu0 0.0
    %v174 = vand.u32 %v121, 4294901760
    %175 = vmatpush1.msra.mxu0 %v174
    %176 = vmatprep.subr.mxu0 0.0
    %v177 = vand.u32 %v122, 4294901760
    %178 = vmatpush1.msra.mxu0 %v177
    %179 = vmatprep.subr.mxu0 0.0
    %v180 = vand.u32 %v123, 4294901760
    %181 = vmatpush1.msra.mxu0 %v180
    %182 = vmatprep.subr.mxu0 0.0
    %v183 = vand.u32 %v124, 4294901760
    %184 = vmatpush1.msra.mxu0 %v183
    %185 = vmatprep.subr.mxu0 0.0
    %186 = vmatpush1.msra.mxu0 0.0
    %187 = vmatprep.subr.mxu0 0.0
    %188 = vmatpush1.msra.mxu0 0.0
    %189 = vmatprep.subr.mxu0 0.0
    %190 = vmatpush1.msra.mxu0 0.0
    %191 = vmatprep.subr.mxu0 0.0
    %192 = vmatpush1.msra.mxu0 0.0
    %193 = vmatprep.subr.mxu0 0.0
    %194 = vmatpush1.msra.mxu0 0.0
    %195 = vmatprep.subr.mxu0 0.0
    %196 = vmatpush1.msra.mxu0 0.0
    %197 = vmatprep.subr.mxu0 0.0
    %198 = vmatpush1.msra.mxu0 0.0
    %199 = vmatprep.subr.mxu0 0.0
    %200 = vmatpush1.msra.mxu0 0.0
    %201 = vmatprep.subr.mxu0 0.0
    %202 = vmatpush1.msra.mxu0 0.0
    %203 = vmatprep.subr.mxu0 0.0
    %204 = vmatpush1.msra.mxu0 0.0
    %205 = vmatprep.subr.mxu0 0.0
    %206 = vmatpush1.msra.mxu0 0.0
    %207 = vmatprep.subr.mxu0 0.0
    %208 = vmatpush1.msra.mxu0 0.0
    %209 = vmatprep.subr.mxu0 0.0
    %210 = vmatpush1.msra.mxu0 0.0
    %211 = vmatprep.subr.mxu0 0.0
    %212 = vmatpush1.msra.mxu0 0.0
    %213 = vmatprep.subr.mxu0 0.0
    %214 = vmatpush1.msra.mxu0 0.0
    %215 = vmatprep.subr.mxu0 0.0
    %216 = vmatpush1.msra.mxu0 0.0
    %217 = vmatprep.mubr.f32.mxu0 0.0
    %v218 = vand.u32 %v135, 4294901760
    %v219 = vsub.f32 %v135, %v218
    %v220 = vand.u32 %v219, 4294901760
    %v221 = vsub.f32 %v219, %v220
    %v222 = vand.u32 %v221, 4294901760
    %223 = vmatmul.mubr.f32.gmra.mrb[0].mxu0 %v222
    %v224 = vpop.f32.mrb[0].mxu0
    %v225 = vadd.f32 0.0, %v224
    %v226 = vpop.f32.mrb[0].mxu0
    %227 = vmatprep.mubr.f32.mxu0 0.0
    %v228 = vand.u32 %v136, 4294901760
    %v229 = vsub.f32 %v136, %v228
    %v230 = vand.u32 %v229, 4294901760
    %v231 = vsub.f32 %v229, %v230
    %v232 = vand.u32 %v231, 4294901760
    %233 = vmatmul.mubr.f32.gmra.mrb[0].mxu0 %v232
    %v234 = vpop.f32.mrb[0].mxu0
    %v235 = vadd.f32 0.0, %v234
    %v236 = vpop.f32.mrb[0].mxu0
    %237 = vdwg.mxu0
    %238 = vmatprep.subr.mxu0 0.0
    %v239 = vand.u32 %v109, 4294901760
    %v240 = vsub.f32 %v109, %v239
    %v241 = vand.u32 %v240, 4294901760
    %v242 = vsub.f32 %v240, %v241
    %v243 = vand.u32 %v242, 4294901760
    %244 = vmatpush1.msra.mxu0 %v243
    %245 = vmatprep.subr.mxu0 0.0
    %v246 = vand.u32 %v110, 4294901760
    %v247 = vsub.f32 %v110, %v246
    %v248 = vand.u32 %v247, 4294901760
    %v249 = vsub.f32 %v247, %v248
    %v250 = vand.u32 %v249, 4294901760
    %251 = vmatpush1.msra.mxu0 %v250
    %252 = vmatprep.subr.mxu0 0.0
    %v253 = vand.u32 %v111, 4294901760
    %v254 = vsub.f32 %v111, %v253
    %v255 = vand.u32 %v254, 4294901760
    %v256 = vsub.f32 %v254, %v255
    %v257 = vand.u32 %v256, 4294901760
    %258 = vmatpush1.msra.mxu0 %v257
    %259 = vmatprep.subr.mxu0 0.0
    %v260 = vand.u32 %v112, 4294901760
    %v261 = vsub.f32 %v112, %v260
    %v262 = vand.u32 %v261, 4294901760
    %v263 = vsub.f32 %v261, %v262
    %v264 = vand.u32 %v263, 4294901760
    %265 = vmatpush1.msra.mxu0 %v264
    %266 = vmatprep.subr.mxu0 0.0
    %v267 = vand.u32 %v113, 4294901760
    %v268 = vsub.f32 %v113, %v267
    %v269 = vand.u32 %v268, 4294901760
    %v270 = vsub.f32 %v268, %v269
    %v271 = vand.u32 %v270, 4294901760
    %272 = vmatpush1.msra.mxu0 %v271
    %273 = vmatprep.subr.mxu0 0.0
    %v274 = vand.u32 %v114, 4294901760
    %v275 = vsub.f32 %v114, %v274
    %v276 = vand.u32 %v275, 4294901760
    %v277 = vsub.f32 %v275, %v276
    %v278 = vand.u32 %v277, 4294901760
    %279 = vmatpush1.msra.mxu0 %v278
    %280 = vmatprep.subr.mxu0 0.0
    %v281 = vand.u32 %v115, 4294901760
    %v282 = vsub.f32 %v115, %v281
    %v283 = vand.u32 %v282, 4294901760
    %v284 = vsub.f32 %v282, %v283
    %v285 = vand.u32 %v284, 4294901760
    %286 = vmatpush1.msra.mxu0 %v285
    %287 = vmatprep.subr.mxu0 0.0
    %v288 = vand.u32 %v116, 4294901760
    %v289 = vsub.f32 %v116, %v288
    %v290 = vand.u32 %v289, 4294901760
    %v291 = vsub.f32 %v289, %v290
    %v292 = vand.u32 %v291, 4294901760
    %293 = vmatpush1.msra.mxu0 %v292
    %294 = vmatprep.subr.mxu0 0.0
    %v295 = vand.u32 %v117, 4294901760
    %v296 = vsub.f32 %v117, %v295
    %v297 = vand.u32 %v296, 4294901760
    %v298 = vsub.f32 %v296, %v297
    %v299 = vand.u32 %v298, 4294901760
    %300 = vmatpush1.msra.mxu0 %v299
    %301 = vmatprep.subr.mxu0 0.0
    %v302 = vand.u32 %v118, 4294901760
    %v303 = vsub.f32 %v118, %v302
    %v304 = vand.u32 %v303, 4294901760
    %v305 = vsub.f32 %v303, %v304
    %v306 = vand.u32 %v305, 4294901760
    %307 = vmatpush1.msra.mxu0 %v306
    %308 = vmatprep.subr.mxu0 0.0
    %v309 = vand.u32 %v119, 4294901760
    %v310 = vsub.f32 %v119, %v309
    %v311 = vand.u32 %v310, 4294901760
    %v312 = vsub.f32 %v310, %v311
    %v313 = vand.u32 %v312, 4294901760
    %314 = vmatpush1.msra.mxu0 %v313
    %315 = vmatprep.subr.mxu0 0.0
    %v316 = vand.u32 %v120, 4294901760
    %v317 = vsub.f32 %v120, %v316
    %v318 = vand.u32 %v317, 4294901760
    %v319 = vsub.f32 %v317, %v318
    %v320 = vand.u32 %v319, 4294901760
    %321 = vmatpush1.msra.mxu0 %v320
    %322 = vmatprep.subr.mxu0 0.0
    %v323 = vand.u32 %v121, 4294901760
    %v324 = vsub.f32 %v121, %v323
    %v325 = vand.u32 %v324, 4294901760
    %v326 = vsub.f32 %v324, %v325
    %v327 = vand.u32 %v326, 4294901760
    %328 = vmatpush1.msra.mxu0 %v327
    %329 = vmatprep.subr.mxu0 0.0
    %v330 = vand.u32 %v122, 4294901760
    %v331 = vsub.f32 %v122, %v330
    %v332 = vand.u32 %v331, 4294901760
    %v333 = vsub.f32 %v331, %v332
    %v334 = vand.u32 %v333, 4294901760
    %335 = vmatpush1.msra.mxu0 %v334
    %336 = vmatprep.subr.mxu0 0.0
    %v337 = vand.u32 %v123, 4294901760
    %v338 = vsub.f32 %v123, %v337
    %v339 = vand.u32 %v338, 4294901760
    %v340 = vsub.f32 %v338, %v339
    %v341 = vand.u32 %v340, 4294901760
    %342 = vmatpush1.msra.mxu0 %v341
    %343 = vmatprep.subr.mxu0 0.0
    %v344 = vand.u32 %v124, 4294901760
    %v345 = vsub.f32 %v124, %v344
    %v346 = vand.u32 %v345, 4294901760
    %v347 = vsub.f32 %v345, %v346
    %v348 = vand.u32 %v347, 4294901760
    %349 = vmatpush1.msra.mxu0 %v348
    %350 = vmatprep.subr.mxu0 0.0
    %351 = vmatpush1.msra.mxu0 0.0
    %352 = vmatprep.subr.mxu0 0.0
    %353 = vmatpush1.msra.mxu0 0.0
    %354 = vmatprep.subr.mxu0 0.0
    %355 = vmatpush1.msra.mxu0 0.0
    %356 = vmatprep.subr.mxu0 0.0
    %357 = vmatpush1.msra.mxu0 0.0
    %358 = vmatprep.subr.mxu0 0.0
    %359 = vmatpush1.msra.mxu0 0.0
    %360 = vmatprep.subr.mxu0 0.0
    %361 = vmatpush1.msra.mxu0 0.0
    %362 = vmatprep.subr.mxu0 0.0
    %363 = vmatpush1.msra.mxu0 0.0
    %364 = vmatprep.subr.mxu0 0.0
    %365 = vmatpush1.msra.mxu0 0.0
    %366 = vmatprep.subr.mxu0 0.0
    %367 = vmatpush1.msra.mxu0 0.0
    %368 = vmatprep.subr.mxu0 0.0
    %369 = vmatpush1.msra.mxu0 0.0
    %370 = vmatprep.subr.mxu0 0.0
    %371 = vmatpush1.msra.mxu0 0.0
    %372 = vmatprep.subr.mxu0 0.0
    %373 = vmatpush1.msra.mxu0 0.0
    %374 = vmatprep.subr.mxu0 0.0
    %375 = vmatpush1.msra.mxu0 0.0
    %376 = vmatprep.subr.mxu0 0.0
    %377 = vmatpush1.msra.mxu0 0.0
    %378 = vmatprep.subr.mxu0 0.0
    %379 = vmatpush1.msra.mxu0 0.0
    %380 = vmatprep.subr.mxu0 0.0
    %381 = vmatpush1.msra.mxu0 0.0
    %382 = vmatprep.mubr.f32.mxu0 0.0
    %v383 = vand.u32 %v135, 4294901760
    %384 = vmatmul.mubr.f32.gmra.mrb[0].mxu0 %v383
    %v385 = vpop.f32.mrb[0].mxu0
    %v386 = vadd.f32 %v225, %v385
    %v387 = vpop.f32.mrb[0].mxu0
    %388 = vmatprep.mubr.f32.mxu0 0.0
    %v389 = vand.u32 %v136, 4294901760
    %390 = vmatmul.mubr.f32.gmra.mrb[0].mxu0 %v389
    %v391 = vpop.f32.mrb[0].mxu0
    %v392 = vadd.f32 %v235, %v391
    %v393 = vpop.f32.mrb[0].mxu0
    %394 = vdwg.mxu0
    %395 = vmatprep.subr.mxu0 0.0
    %v396 = vand.u32 %v109, 4294901760
    %v397 = vsub.f32 %v109, %v396
    %398 = vmatpush1.msra.mxu0 %v397
    %399 = vmatprep.subr.mxu0 0.0
    %v400 = vand.u32 %v110, 4294901760
    %v401 = vsub.f32 %v110, %v400
    %402 = vmatpush1.msra.mxu0 %v401
    %403 = vmatprep.subr.mxu0 0.0
    %v404 = vand.u32 %v111, 4294901760
    %v405 = vsub.f32 %v111, %v404
    %406 = vmatpush1.msra.mxu0 %v405
    %407 = vmatprep.subr.mxu0 0.0
    %v408 = vand.u32 %v112, 4294901760
    %v409 = vsub.f32 %v112, %v408
    %410 = vmatpush1.msra.mxu0 %v409
    %411 = vmatprep.subr.mxu0 0.0
    %v412 = vand.u32 %v113, 4294901760
    %v413 = vsub.f32 %v113, %v412
    %414 = vmatpush1.msra.mxu0 %v413
    %415 = vmatprep.subr.mxu0 0.0
    %v416 = vand.u32 %v114, 4294901760
    %v417 = vsub.f32 %v114, %v416
    %418 = vmatpush1.msra.mxu0 %v417
    %419 = vmatprep.subr.mxu0 0.0
    %v420 = vand.u32 %v115, 4294901760
    %v421 = vsub.f32 %v115, %v420
    %422 = vmatpush1.msra.mxu0 %v421
    %423 = vmatprep.subr.mxu0 0.0
    %v424 = vand.u32 %v116, 4294901760
    %v425 = vsub.f32 %v116, %v424
    %426 = vmatpush1.msra.mxu0 %v425
    %427 = vmatprep.subr.mxu0 0.0
    %v428 = vand.u32 %v117, 4294901760
    %v429 = vsub.f32 %v117, %v428
    %430 = vmatpush1.msra.mxu0 %v429
    %431 = vmatprep.subr.mxu0 0.0
    %v432 = vand.u32 %v118, 4294901760
    %v433 = vsub.f32 %v118, %v432
    %434 = vmatpush1.msra.mxu0 %v433
    %435 = vmatprep.subr.mxu0 0.0
    %v436 = vand.u32 %v119, 4294901760
    %v437 = vsub.f32 %v119, %v436
    %438 = vmatpush1.msra.mxu0 %v437
    %439 = vmatprep.subr.mxu0 0.0
    %v440 = vand.u32 %v120, 4294901760
    %v441 = vsub.f32 %v120, %v440
    %442 = vmatpush1.msra.mxu0 %v441
    %443 = vmatprep.subr.mxu0 0.0
    %v444 = vand.u32 %v121, 4294901760
    %v445 = vsub.f32 %v121, %v444
    %446 = vmatpush1.msra.mxu0 %v445
    %447 = vmatprep.subr.mxu0 0.0
    %v448 = vand.u32 %v122, 4294901760
    %v449 = vsub.f32 %v122, %v448
    %450 = vmatpush1.msra.mxu0 %v449
    %451 = vmatprep.subr.mxu0 0.0
    %v452 = vand.u32 %v123, 4294901760
    %v453 = vsub.f32 %v123, %v452
    %454 = vmatpush1.msra.mxu0 %v453
    %455 = vmatprep.subr.mxu0 0.0
    %v456 = vand.u32 %v124, 4294901760
    %v457 = vsub.f32 %v124, %v456
    %458 = vmatpush1.msra.mxu0 %v457
    %459 = vmatprep.subr.mxu0 0.0
    %460 = vmatpush1.msra.mxu0 0.0
    %461 = vmatprep.subr.mxu0 0.0
    %462 = vmatpush1.msra.mxu0 0.0
    %463 = vmatprep.subr.mxu0 0.0
    %464 = vmatpush1.msra.mxu0 0.0
    %465 = vmatprep.subr.mxu0 0.0
    %466 = vmatpush1.msra.mxu0 0.0
    %467 = vmatprep.subr.mxu0 0.0
    %468 = vmatpush1.msra.mxu0 0.0
    %469 = vmatprep.subr.mxu0 0.0
    %470 = vmatpush1.msra.mxu0 0.0
    %471 = vmatprep.subr.mxu0 0.0
    %472 = vmatpush1.msra.mxu0 0.0
    %473 = vmatprep.subr.mxu0 0.0
    %474 = vmatpush1.msra.mxu0 0.0
    %475 = vmatprep.subr.mxu0 0.0
    %476 = vmatpush1.msra.mxu0 0.0
    %477 = vmatprep.subr.mxu0 0.0
    %478 = vmatpush1.msra.mxu0 0.0
    %479 = vmatprep.subr.mxu0 0.0
    %480 = vmatpush1.msra.mxu0 0.0
    %481 = vmatprep.subr.mxu0 0.0
    %482 = vmatpush1.msra.mxu0 0.0
    %483 = vmatprep.subr.mxu0 0.0
    %484 = vmatpush1.msra.mxu0 0.0
    %485 = vmatprep.subr.mxu0 0.0
    %486 = vmatpush1.msra.mxu0 0.0
    %487 = vmatprep.subr.mxu0 0.0
    %488 = vmatpush1.msra.mxu0 0.0
    %489 = vmatprep.subr.mxu0 0.0
    %490 = vmatpush1.msra.mxu0 0.0
    %491 = vmatprep.mubr.f32.mxu0 0.0
    %v492 = vand.u32 %v135, 4294901760
    %v493 = vsub.f32 %v135, %v492
    %494 = vmatmul.mubr.f32.gmra.mrb[0].mxu0 %v493
    %v495 = vpop.f32.mrb[0].mxu0
    %v496 = vadd.f32 %v386, %v495
    %v497 = vpop.f32.mrb[0].mxu0
    %498 = vmatprep.mubr.f32.mxu0 0.0
    %v499 = vand.u32 %v136, 4294901760
    %v500 = vsub.f32 %v136, %v499
    %501 = vmatmul.mubr.f32.gmra.mrb[0].mxu0 %v500
    %v502 = vpop.f32.mrb[0].mxu0
    %v503 = vadd.f32 %v392, %v502
    %v504 = vpop.f32.mrb[0].mxu0
    %505 = vdwg.mxu0
    %506 = vmatprep.subr.mxu0 0.0
    %v507 = vand.u32 %v109, 4294901760
    %508 = vmatpush1.msra.mxu0 %v507
    %509 = vmatprep.subr.mxu0 0.0
    %v510 = vand.u32 %v110, 4294901760
    %511 = vmatpush1.msra.mxu0 %v510
    %512 = vmatprep.subr.mxu0 0.0
    %v513 = vand.u32 %v111, 4294901760
    %514 = vmatpush1.msra.mxu0 %v513
    %515 = vmatprep.subr.mxu0 0.0
    %v516 = vand.u32 %v112, 4294901760
    %517 = vmatpush1.msra.mxu0 %v516
    %518 = vmatprep.subr.mxu0 0.0
    %v519 = vand.u32 %v113, 4294901760
    %520 = vmatpush1.msra.mxu0 %v519
    %521 = vmatprep.subr.mxu0 0.0
    %v522 = vand.u32 %v114, 4294901760
    %523 = vmatpush1.msra.mxu0 %v522
    %524 = vmatprep.subr.mxu0 0.0
    %v525 = vand.u32 %v115, 4294901760
    %526 = vmatpush1.msra.mxu0 %v525
    %527 = vmatprep.subr.mxu0 0.0
    %v528 = vand.u32 %v116, 4294901760
    %529 = vmatpush1.msra.mxu0 %v528
    %530 = vmatprep.subr.mxu0 0.0
    %v531 = vand.u32 %v117, 4294901760
    %532 = vmatpush1.msra.mxu0 %v531
    %533 = vmatprep.subr.mxu0 0.0
    %v534 = vand.u32 %v118, 4294901760
    %535 = vmatpush1.msra.mxu0 %v534
    %536 = vmatprep.subr.mxu0 0.0
    %v537 = vand.u32 %v119, 4294901760
    %538 = vmatpush1.msra.mxu0 %v537
    %539 = vmatprep.subr.mxu0 0.0
    %v540 = vand.u32 %v120, 4294901760
    %541 = vmatpush1.msra.mxu0 %v540
    %542 = vmatprep.subr.mxu0 0.0
    %v543 = vand.u32 %v121, 4294901760
    %544 = vmatpush1.msra.mxu0 %v543
    %545 = vmatprep.subr.mxu0 0.0
    %v546 = vand.u32 %v122, 4294901760
    %547 = vmatpush1.msra.mxu0 %v546
    %548 = vmatprep.subr.mxu0 0.0
    %v549 = vand.u32 %v123, 4294901760
    %550 = vmatpush1.msra.mxu0 %v549
    %551 = vmatprep.subr.mxu0 0.0
    %v552 = vand.u32 %v124, 4294901760
    %553 = vmatpush1.msra.mxu0 %v552
    %554 = vmatprep.subr.mxu0 0.0
    %555 = vmatpush1.msra.mxu0 0.0
    %556 = vmatprep.subr.mxu0 0.0
    %557 = vmatpush1.msra.mxu0 0.0
    %558 = vmatprep.subr.mxu0 0.0
    %559 = vmatpush1.msra.mxu0 0.0
    %560 = vmatprep.subr.mxu0 0.0
    %561 = vmatpush1.msra.mxu0 0.0
    %562 = vmatprep.subr.mxu0 0.0
    %563 = vmatpush1.msra.mxu0 0.0
    %564 = vmatprep.subr.mxu0 0.0
    %565 = vmatpush1.msra.mxu0 0.0
    %566 = vmatprep.subr.mxu0 0.0
    %567 = vmatpush1.msra.mxu0 0.0
    %568 = vmatprep.subr.mxu0 0.0
    %569 = vmatpush1.msra.mxu0 0.0
    %570 = vmatprep.subr.mxu0 0.0
    %571 = vmatpush1.msra.mxu0 0.0
    %572 = vmatprep.subr.mxu0 0.0
    %573 = vmatpush1.msra.mxu0 0.0
    %574 = vmatprep.subr.mxu0 0.0
    %575 = vmatpush1.msra.mxu0 0.0
    %576 = vmatprep.subr.mxu0 0.0
    %577 = vmatpush1.msra.mxu0 0.0
    %578 = vmatprep.subr.mxu0 0.0
    %579 = vmatpush1.msra.mxu0 0.0
    %580 = vmatprep.subr.mxu0 0.0
    %581 = vmatpush1.msra.mxu0 0.0
    %582 = vmatprep.subr.mxu0 0.0
    %583 = vmatpush1.msra.mxu0 0.0
    %584 = vmatprep.subr.mxu0 0.0
    %585 = vmatpush1.msra.mxu0 0.0
    %586 = vmatprep.mubr.f32.mxu0 0.0
    %v587 = vand.u32 %v135, 4294901760
    %v588 = vsub.f32 %v135, %v587
    %v589 = vand.u32 %v588, 4294901760
    %590 = vmatmul.mubr.f32.gmra.mrb[0].mxu0 %v589
    %v591 = vpop.f32.mrb[0].mxu0
    %v592 = vadd.f32 %v496, %v591
    %v593 = vpop.f32.mrb[0].mxu0
    %594 = vmatprep.mubr.f32.mxu0 0.0
    %v595 = vand.u32 %v136, 4294901760
    %v596 = vsub.f32 %v136, %v595
    %v597 = vand.u32 %v596, 4294901760
    %598 = vmatmul.mubr.f32.gmra.mrb[0].mxu0 %v597
    %v599 = vpop.f32.mrb[0].mxu0
    %v600 = vadd.f32 %v503, %v599
    %v601 = vpop.f32.mrb[0].mxu0
    %602 = vdwg.mxu0
    %603 = vmatprep.subr.mxu0 0.0
    %v604 = vand.u32 %v109, 4294901760
    %v605 = vsub.f32 %v109, %v604
    %v606 = vand.u32 %v605, 4294901760
    %607 = vmatpush1.msra.mxu0 %v606
    %608 = vmatprep.subr.mxu0 0.0
    %v609 = vand.u32 %v110, 4294901760
    %v610 = vsub.f32 %v110, %v609
    %v611 = vand.u32 %v610, 4294901760
    %612 = vmatpush1.msra.mxu0 %v611
    %613 = vmatprep.subr.mxu0 0.0
    %v614 = vand.u32 %v111, 4294901760
    %v615 = vsub.f32 %v111, %v614
    %v616 = vand.u32 %v615, 4294901760
    %617 = vmatpush1.msra.mxu0 %v616
    %618 = vmatprep.subr.mxu0 0.0
    %v619 = vand.u32 %v112, 4294901760
    %v620 = vsub.f32 %v112, %v619
    %v621 = vand.u32 %v620, 4294901760
    %622 = vmatpush1.msra.mxu0 %v621
    %623 = vmatprep.subr.mxu0 0.0
    %v624 = vand.u32 %v113, 4294901760
    %v625 = vsub.f32 %v113, %v624
    %v626 = vand.u32 %v625, 4294901760
    %627 = vmatpush1.msra.mxu0 %v626
    %628 = vmatprep.subr.mxu0 0.0
    %v629 = vand.u32 %v114, 4294901760
    %v630 = vsub.f32 %v114, %v629
    %v631 = vand.u32 %v630, 4294901760
    %632 = vmatpush1.msra.mxu0 %v631
    %633 = vmatprep.subr.mxu0 0.0
    %v634 = vand.u32 %v115, 4294901760
    %v635 = vsub.f32 %v115, %v634
    %v636 = vand.u32 %v635, 4294901760
    %637 = vmatpush1.msra.mxu0 %v636
    %638 = vmatprep.subr.mxu0 0.0
    %v639 = vand.u32 %v116, 4294901760
    %v640 = vsub.f32 %v116, %v639
    %v641 = vand.u32 %v640, 4294901760
    %642 = vmatpush1.msra.mxu0 %v641
    %643 = vmatprep.subr.mxu0 0.0
    %v644 = vand.u32 %v117, 4294901760
    %v645 = vsub.f32 %v117, %v644
    %v646 = vand.u32 %v645, 4294901760
    %647 = vmatpush1.msra.mxu0 %v646
    %648 = vmatprep.subr.mxu0 0.0
    %v649 = vand.u32 %v118, 4294901760
    %v650 = vsub.f32 %v118, %v649
    %v651 = vand.u32 %v650, 4294901760
    %652 = vmatpush1.msra.mxu0 %v651
    %653 = vmatprep.subr.mxu0 0.0
    %v654 = vand.u32 %v119, 4294901760
    %v655 = vsub.f32 %v119, %v654
    %v656 = vand.u32 %v655, 4294901760
    %657 = vmatpush1.msra.mxu0 %v656
    %658 = vmatprep.subr.mxu0 0.0
    %v659 = vand.u32 %v120, 4294901760
    %v660 = vsub.f32 %v120, %v659
    %v661 = vand.u32 %v660, 4294901760
    %662 = vmatpush1.msra.mxu0 %v661
    %663 = vmatprep.subr.mxu0 0.0
    %v664 = vand.u32 %v121, 4294901760
    %v665 = vsub.f32 %v121, %v664
    %v666 = vand.u32 %v665, 4294901760
    %667 = vmatpush1.msra.mxu0 %v666
    %668 = vmatprep.subr.mxu0 0.0
    %v669 = vand.u32 %v122, 4294901760
    %v670 = vsub.f32 %v122, %v669
    %v671 = vand.u32 %v670, 4294901760
    %672 = vmatpush1.msra.mxu0 %v671
    %673 = vmatprep.subr.mxu0 0.0
    %v674 = vand.u32 %v123, 4294901760
    %v675 = vsub.f32 %v123, %v674
    %v676 = vand.u32 %v675, 4294901760
    %677 = vmatpush1.msra.mxu0 %v676
    %678 = vmatprep.subr.mxu0 0.0
    %v679 = vand.u32 %v124, 4294901760
    %v680 = vsub.f32 %v124, %v679
    %v681 = vand.u32 %v680, 4294901760
    %682 = vmatpush1.msra.mxu0 %v681
    %683 = vmatprep.subr.mxu0 0.0
    %684 = vmatpush1.msra.mxu0 0.0
    %685 = vmatprep.subr.mxu0 0.0
    %686 = vmatpush1.msra.mxu0 0.0
    %687 = vmatprep.subr.mxu0 0.0
    %688 = vmatpush1.msra.mxu0 0.0
    %689 = vmatprep.subr.mxu0 0.0
    %690 = vmatpush1.msra.mxu0 0.0
    %691 = vmatprep.subr.mxu0 0.0
    %692 = vmatpush1.msra.mxu0 0.0
    %693 = vmatprep.subr.mxu0 0.0
    %694 = vmatpush1.msra.mxu0 0.0
    %695 = vmatprep.subr.mxu0 0.0
    %696 = vmatpush1.msra.mxu0 0.0
    %697 = vmatprep.subr.mxu0 0.0
    %698 = vmatpush1.msra.mxu0 0.0
    %699 = vmatprep.subr.mxu0 0.0
    %700 = vmatpush1.msra.mxu0 0.0
    %701 = vmatprep.subr.mxu0 0.0
    %702 = vmatpush1.msra.mxu0 0.0
    %703 = vmatprep.subr.mxu0 0.0
    %704 = vmatpush1.msra.mxu0 0.0
    %705 = vmatprep.subr.mxu0 0.0
    %706 = vmatpush1.msra.mxu0 0.0
    %707 = vmatprep.subr.mxu0 0.0
    %708 = vmatpush1.msra.mxu0 0.0
    %709 = vmatprep.subr.mxu0 0.0
    %710 = vmatpush1.msra.mxu0 0.0
    %711 = vmatprep.subr.mxu0 0.0
    %712 = vmatpush1.msra.mxu0 0.0
    %713 = vmatprep.subr.mxu0 0.0
    %714 = vmatpush1.msra.mxu0 0.0
    %715 = vmatprep.mubr.f32.mxu0 0.0
    %v716 = vand.u32 %v135, 4294901760
    %717 = vmatmul.mubr.f32.gmra.mrb[0].mxu0 %v716
    %v718 = vpop.f32.mrb[0].mxu0
    %v719 = vadd.f32 %v592, %v718
    %v720 = vpop.f32.mrb[0].mxu0
    %721 = vmatprep.mubr.f32.mxu0 0.0
    %v722 = vand.u32 %v136, 4294901760
    %723 = vmatmul.mubr.f32.gmra.mrb[0].mxu0 %v722
    %v724 = vpop.f32.mrb[0].mxu0
    %v725 = vadd.f32 %v600, %v724
    %v726 = vpop.f32.mrb[0].mxu0
    %727 = vdwg.mxu0
    %728 = vmatprep.subr.mxu0 0.0
    %v729 = vand.u32 %v109, 4294901760
    %730 = vmatpush1.msra.mxu0 %v729
    %731 = vmatprep.subr.mxu0 0.0
    %v732 = vand.u32 %v110, 4294901760
    %733 = vmatpush1.msra.mxu0 %v732
    %734 = vmatprep.subr.mxu0 0.0
    %v735 = vand.u32 %v111, 4294901760
    %736 = vmatpush1.msra.mxu0 %v735
    %737 = vmatprep.subr.mxu0 0.0
    %v738 = vand.u32 %v112, 4294901760
    %739 = vmatpush1.msra.mxu0 %v738
    %740 = vmatprep.subr.mxu0 0.0
    %v741 = vand.u32 %v113, 4294901760
    %742 = vmatpush1.msra.mxu0 %v741
    %743 = vmatprep.subr.mxu0 0.0
    %v744 = vand.u32 %v114, 4294901760
    %745 = vmatpush1.msra.mxu0 %v744
    %746 = vmatprep.subr.mxu0 0.0
    %v747 = vand.u32 %v115, 4294901760
    %748 = vmatpush1.msra.mxu0 %v747
    %749 = vmatprep.subr.mxu0 0.0
    %v750 = vand.u32 %v116, 4294901760
    %751 = vmatpush1.msra.mxu0 %v750
    %752 = vmatprep.subr.mxu0 0.0
    %v753 = vand.u32 %v117, 4294901760
    %754 = vmatpush1.msra.mxu0 %v753
    %755 = vmatprep.subr.mxu0 0.0
    %v756 = vand.u32 %v118, 4294901760
    %757 = vmatpush1.msra.mxu0 %v756
    %758 = vmatprep.subr.mxu0 0.0
    %v759 = vand.u32 %v119, 4294901760
    %760 = vmatpush1.msra.mxu0 %v759
    %761 = vmatprep.subr.mxu0 0.0
    %v762 = vand.u32 %v120, 4294901760
    %763 = vmatpush1.msra.mxu0 %v762
    %764 = vmatprep.subr.mxu0 0.0
    %v765 = vand.u32 %v121, 4294901760
    %766 = vmatpush1.msra.mxu0 %v765
    %767 = vmatprep.subr.mxu0 0.0
    %v768 = vand.u32 %v122, 4294901760
    %769 = vmatpush1.msra.mxu0 %v768
    %770 = vmatprep.subr.mxu0 0.0
    %v771 = vand.u32 %v123, 4294901760
    %772 = vmatpush1.msra.mxu0 %v771
    %773 = vmatprep.subr.mxu0 0.0
    %v774 = vand.u32 %v124, 4294901760
    %775 = vmatpush1.msra.mxu0 %v774
    %776 = vmatprep.subr.mxu0 0.0
    %777 = vmatpush1.msra.mxu0 0.0
    %778 = vmatprep.subr.mxu0 0.0
    %779 = vmatpush1.msra.mxu0 0.0
    %780 = vmatprep.subr.mxu0 0.0
    %781 = vmatpush1.msra.mxu0 0.0
    %782 = vmatprep.subr.mxu0 0.0
    %783 = vmatpush1.msra.mxu0 0.0
    %784 = vmatprep.subr.mxu0 0.0
    %785 = vmatpush1.msra.mxu0 0.0
    %786 = vmatprep.subr.mxu0 0.0
    %787 = vmatpush1.msra.mxu0 0.0
    %788 = vmatprep.subr.mxu0 0.0
    %789 = vmatpush1.msra.mxu0 0.0
    %790 = vmatprep.subr.mxu0 0.0
    %791 = vmatpush1.msra.mxu0 0.0
    %792 = vmatprep.subr.mxu0 0.0
    %793 = vmatpush1.msra.mxu0 0.0
    %794 = vmatprep.subr.mxu0 0.0
    %795 = vmatpush1.msra.mxu0 0.0
    %796 = vmatprep.subr.mxu0 0.0
    %797 = vmatpush1.msra.mxu0 0.0
    %798 = vmatprep.subr.mxu0 0.0
    %799 = vmatpush1.msra.mxu0 0.0
    %800 = vmatprep.subr.mxu0 0.0
    %801 = vmatpush1.msra.mxu0 0.0
    %802 = vmatprep.subr.mxu0 0.0
    %803 = vmatpush1.msra.mxu0 0.0
    %804 = vmatprep.subr.mxu0 0.0
    %805 = vmatpush1.msra.mxu0 0.0
    %806 = vmatprep.subr.mxu0 0.0
    %807 = vmatpush1.msra.mxu0 0.0
    %808 = vmatprep.mubr.f32.mxu0 0.0
    %v809 = vand.u32 %v135, 4294901760
    %810 = vmatmul.mubr.f32.gmra.mrb[0].mxu0 %v809
    %v811 = vpop.f32.mrb[0].mxu0
    %v812 = vadd.f32 %v719, %v811
    %v813 = vpop.f32.mrb[0].mxu0
    %814 = vmatprep.mubr.f32.mxu0 0.0
    %v815 = vand.u32 %v136, 4294901760
    %816 = vmatmul.mubr.f32.gmra.mrb[0].mxu0 %v815
    %v817 = vpop.f32.mrb[0].mxu0
    %v818 = vadd.f32 %v725, %v817
    %v819 = vpop.f32.mrb[0].mxu0
    %820 = vdwg.mxu0
    %v821 = vrsqrt.pop %v812
    %v822 = vrsqrt.pop %v818
    %v823 = vmul.f32 %v821, 15.0
    %v824 = vmul.f32 %v822, 15.0
    %v825 = vmin.f32 %v823, 1.0
    %v826 = vmin.f32 %v824, 1.0
    %vm827 = vcmask 64512
    %v829 = vsel %vm827, %v825, 0
    %v832 = vsel %vm827, %v826, 0
    %834 = vmatprep.subr.mxu0 0.0
    %v835 = vand.u32 %v132, 4294901760
    %836 = vmatpush1.msra.mxu0 %v835
    %837 = vmatprep.subr.mxu0 0.0
    %838 = vmatpush1.msra.mxu0 0.0
    %839 = vmatprep.subr.mxu0 0.0
    %840 = vmatpush1.msra.mxu0 0.0
    %841 = vmatprep.subr.mxu0 0.0
    %842 = vmatpush1.msra.mxu0 0.0
    %843 = vmatprep.subr.mxu0 0.0
    %844 = vmatpush1.msra.mxu0 0.0
    %845 = vmatprep.subr.mxu0 0.0
    %846 = vmatpush1.msra.mxu0 0.0
    %847 = vmatprep.subr.mxu0 0.0
    %848 = vmatpush1.msra.mxu0 0.0
    %849 = vmatprep.subr.mxu0 0.0
    %850 = vmatpush1.msra.mxu0 0.0
    %851 = vmatprep.subr.mxu0 0.0
    %852 = vmatpush1.msra.mxu0 0.0
    %853 = vmatprep.subr.mxu0 0.0
    %854 = vmatpush1.msra.mxu0 0.0
    %855 = vmatprep.subr.mxu0 0.0
    %856 = vmatpush1.msra.mxu0 0.0
    %857 = vmatprep.subr.mxu0 0.0
    %858 = vmatpush1.msra.mxu0 0.0
    %859 = vmatprep.subr.mxu0 0.0
    %860 = vmatpush1.msra.mxu0 0.0
    %861 = vmatprep.subr.mxu0 0.0
    %862 = vmatpush1.msra.mxu0 0.0
    %863 = vmatprep.subr.mxu0 0.0
    %864 = vmatpush1.msra.mxu0 0.0
    %865 = vmatprep.subr.mxu0 0.0
    %866 = vmatpush1.msra.mxu0 0.0
    %867 = vmatprep.subr.mxu0 0.0
    %868 = vmatpush1.msra.mxu0 0.0
    %869 = vmatprep.subr.mxu0 0.0
    %870 = vmatpush1.msra.mxu0 0.0
    %871 = vmatprep.subr.mxu0 0.0
    %872 = vmatpush1.msra.mxu0 0.0
    %873 = vmatprep.subr.mxu0 0.0
    %874 = vmatpush1.msra.mxu0 0.0
    %875 = vmatprep.subr.mxu0 0.0
    %876 = vmatpush1.msra.mxu0 0.0
    %877 = vmatprep.subr.mxu0 0.0
    %878 = vmatpush1.msra.mxu0 0.0
    %879 = vmatprep.subr.mxu0 0.0
    %880 = vmatpush1.msra.mxu0 0.0
    %881 = vmatprep.subr.mxu0 0.0
    %882 = vmatpush1.msra.mxu0 0.0
    %883 = vmatprep.subr.mxu0 0.0
    %884 = vmatpush1.msra.mxu0 0.0
    %885 = vmatprep.subr.mxu0 0.0
    %886 = vmatpush1.msra.mxu0 0.0
    %887 = vmatprep.subr.mxu0 0.0
    %888 = vmatpush1.msra.mxu0 0.0
    %889 = vmatprep.subr.mxu0 0.0
    %890 = vmatpush1.msra.mxu0 0.0
    %891 = vmatprep.subr.mxu0 0.0
    %892 = vmatpush1.msra.mxu0 0.0
    %893 = vmatprep.subr.mxu0 0.0
    %894 = vmatpush1.msra.mxu0 0.0
    %895 = vmatprep.subr.mxu0 0.0
    %896 = vmatpush1.msra.mxu0 0.0
    %897 = vmatprep.subr.mxu0 0.0
    %898 = vmatpush1.msra.mxu0 0.0
    %899 = vmatprep.mubr.f32.mxu0 0.0
    %v900 = vand.u32 %v829, 4294901760
    %v901 = vsub.f32 %v829, %v900
    %v902 = vand.u32 %v901, 4294901760
    %v903 = vsub.f32 %v901, %v902
    %v904 = vand.u32 %v903, 4294901760
    %905 = vmatmul.mubr.f32.gmra.mrb[0].mxu0 %v904
    %v906 = vpop.f32.mrb[0].mxu0
    %v907 = vadd.f32 0.0, %v906
    %v908 = vpop.f32.mrb[0].mxu0
    %909 = vmatprep.mubr.f32.mxu0 0.0
    %v910 = vand.u32 %v832, 4294901760
    %v911 = vsub.f32 %v832, %v910
    %v912 = vand.u32 %v911, 4294901760
    %v913 = vsub.f32 %v911, %v912
    %v914 = vand.u32 %v913, 4294901760
    %915 = vmatmul.mubr.f32.gmra.mrb[0].mxu0 %v914
    %v916 = vpop.f32.mrb[0].mxu0
    %v917 = vadd.f32 0.0, %v916
    %v918 = vpop.f32.mrb[0].mxu0
    %919 = vdwg.mxu0
    %920 = vmatprep.subr.mxu0 0.0
    %v921 = vand.u32 %v132, 4294901760
    %v922 = vsub.f32 %v132, %v921
    %v923 = vand.u32 %v922, 4294901760
    %v924 = vsub.f32 %v922, %v923
    %v925 = vand.u32 %v924, 4294901760
    %926 = vmatpush1.msra.mxu0 %v925
    %927 = vmatprep.subr.mxu0 0.0
    %928 = vmatpush1.msra.mxu0 0.0
    %929 = vmatprep.subr.mxu0 0.0
    %930 = vmatpush1.msra.mxu0 0.0
    %931 = vmatprep.subr.mxu0 0.0
    %932 = vmatpush1.msra.mxu0 0.0
    %933 = vmatprep.subr.mxu0 0.0
    %934 = vmatpush1.msra.mxu0 0.0
    %935 = vmatprep.subr.mxu0 0.0
    %936 = vmatpush1.msra.mxu0 0.0
    %937 = vmatprep.subr.mxu0 0.0
    %938 = vmatpush1.msra.mxu0 0.0
    %939 = vmatprep.subr.mxu0 0.0
    %940 = vmatpush1.msra.mxu0 0.0
    %941 = vmatprep.subr.mxu0 0.0
    %942 = vmatpush1.msra.mxu0 0.0
    %943 = vmatprep.subr.mxu0 0.0
    %944 = vmatpush1.msra.mxu0 0.0
    %945 = vmatprep.subr.mxu0 0.0
    %946 = vmatpush1.msra.mxu0 0.0
    %947 = vmatprep.subr.mxu0 0.0
    %948 = vmatpush1.msra.mxu0 0.0
    %949 = vmatprep.subr.mxu0 0.0
    %950 = vmatpush1.msra.mxu0 0.0
    %951 = vmatprep.subr.mxu0 0.0
    %952 = vmatpush1.msra.mxu0 0.0
    %953 = vmatprep.subr.mxu0 0.0
    %954 = vmatpush1.msra.mxu0 0.0
    %955 = vmatprep.subr.mxu0 0.0
    %956 = vmatpush1.msra.mxu0 0.0
    %957 = vmatprep.subr.mxu0 0.0
    %958 = vmatpush1.msra.mxu0 0.0
    %959 = vmatprep.subr.mxu0 0.0
    %960 = vmatpush1.msra.mxu0 0.0
    %961 = vmatprep.subr.mxu0 0.0
    %962 = vmatpush1.msra.mxu0 0.0
    %963 = vmatprep.subr.mxu0 0.0
    %964 = vmatpush1.msra.mxu0 0.0
    %965 = vmatprep.subr.mxu0 0.0
    %966 = vmatpush1.msra.mxu0 0.0
    %967 = vmatprep.subr.mxu0 0.0
    %968 = vmatpush1.msra.mxu0 0.0
    %969 = vmatprep.subr.mxu0 0.0
    %970 = vmatpush1.msra.mxu0 0.0
    %971 = vmatprep.subr.mxu0 0.0
    %972 = vmatpush1.msra.mxu0 0.0
    %973 = vmatprep.subr.mxu0 0.0
    %974 = vmatpush1.msra.mxu0 0.0
    %975 = vmatprep.subr.mxu0 0.0
    %976 = vmatpush1.msra.mxu0 0.0
    %977 = vmatprep.subr.mxu0 0.0
    %978 = vmatpush1.msra.mxu0 0.0
    %979 = vmatprep.subr.mxu0 0.0
    %980 = vmatpush1.msra.mxu0 0.0
    %981 = vmatprep.subr.mxu0 0.0
    %982 = vmatpush1.msra.mxu0 0.0
    %983 = vmatprep.subr.mxu0 0.0
    %984 = vmatpush1.msra.mxu0 0.0
    %985 = vmatprep.subr.mxu0 0.0
    %986 = vmatpush1.msra.mxu0 0.0
    %987 = vmatprep.subr.mxu0 0.0
    %988 = vmatpush1.msra.mxu0 0.0
    %989 = vmatprep.mubr.f32.mxu0 0.0
    %v990 = vand.u32 %v829, 4294901760
    %991 = vmatmul.mubr.f32.gmra.mrb[0].mxu0 %v990
    %v992 = vpop.f32.mrb[0].mxu0
    %v993 = vadd.f32 %v907, %v992
    %v994 = vpop.f32.mrb[0].mxu0
    %995 = vmatprep.mubr.f32.mxu0 0.0
    %v996 = vand.u32 %v832, 4294901760
    %997 = vmatmul.mubr.f32.gmra.mrb[0].mxu0 %v996
    %v998 = vpop.f32.mrb[0].mxu0
    %v999 = vadd.f32 %v917, %v998
    %v1000 = vpop.f32.mrb[0].mxu0
    %1001 = vdwg.mxu0
    %1002 = vmatprep.subr.mxu0 0.0
    %v1003 = vand.u32 %v132, 4294901760
    %v1004 = vsub.f32 %v132, %v1003
    %1005 = vmatpush1.msra.mxu0 %v1004
    %1006 = vmatprep.subr.mxu0 0.0
    %1007 = vmatpush1.msra.mxu0 0.0
    %1008 = vmatprep.subr.mxu0 0.0
    %1009 = vmatpush1.msra.mxu0 0.0
    %1010 = vmatprep.subr.mxu0 0.0
    %1011 = vmatpush1.msra.mxu0 0.0
    %1012 = vmatprep.subr.mxu0 0.0
    %1013 = vmatpush1.msra.mxu0 0.0
    %1014 = vmatprep.subr.mxu0 0.0
    %1015 = vmatpush1.msra.mxu0 0.0
    %1016 = vmatprep.subr.mxu0 0.0
    %1017 = vmatpush1.msra.mxu0 0.0
    %1018 = vmatprep.subr.mxu0 0.0
    %1019 = vmatpush1.msra.mxu0 0.0
    %1020 = vmatprep.subr.mxu0 0.0
    %1021 = vmatpush1.msra.mxu0 0.0
    %1022 = vmatprep.subr.mxu0 0.0
    %1023 = vmatpush1.msra.mxu0 0.0
    %1024 = vmatprep.subr.mxu0 0.0
    %1025 = vmatpush1.msra.mxu0 0.0
    %1026 = vmatprep.subr.mxu0 0.0
    %1027 = vmatpush1.msra.mxu0 0.0
    %1028 = vmatprep.subr.mxu0 0.0
    %1029 = vmatpush1.msra.mxu0 0.0
    %1030 = vmatprep.subr.mxu0 0.0
    %1031 = vmatpush1.msra.mxu0 0.0
    %1032 = vmatprep.subr.mxu0 0.0
    %1033 = vmatpush1.msra.mxu0 0.0
    %1034 = vmatprep.subr.mxu0 0.0
    %1035 = vmatpush1.msra.mxu0 0.0
    %1036 = vmatprep.subr.mxu0 0.0
    %1037 = vmatpush1.msra.mxu0 0.0
    %1038 = vmatprep.subr.mxu0 0.0
    %1039 = vmatpush1.msra.mxu0 0.0
    %1040 = vmatprep.subr.mxu0 0.0
    %1041 = vmatpush1.msra.mxu0 0.0
    %1042 = vmatprep.subr.mxu0 0.0
    %1043 = vmatpush1.msra.mxu0 0.0
    %1044 = vmatprep.subr.mxu0 0.0
    %1045 = vmatpush1.msra.mxu0 0.0
    %1046 = vmatprep.subr.mxu0 0.0
    %1047 = vmatpush1.msra.mxu0 0.0
    %1048 = vmatprep.subr.mxu0 0.0
    %1049 = vmatpush1.msra.mxu0 0.0
    %1050 = vmatprep.subr.mxu0 0.0
    %1051 = vmatpush1.msra.mxu0 0.0
    %1052 = vmatprep.subr.mxu0 0.0
    %1053 = vmatpush1.msra.mxu0 0.0
    %1054 = vmatprep.subr.mxu0 0.0
    %1055 = vmatpush1.msra.mxu0 0.0
    %1056 = vmatprep.subr.mxu0 0.0
    %1057 = vmatpush1.msra.mxu0 0.0
    %1058 = vmatprep.subr.mxu0 0.0
    %1059 = vmatpush1.msra.mxu0 0.0
    %1060 = vmatprep.subr.mxu0 0.0
    %1061 = vmatpush1.msra.mxu0 0.0
    %1062 = vmatprep.subr.mxu0 0.0
    %1063 = vmatpush1.msra.mxu0 0.0
    %1064 = vmatprep.subr.mxu0 0.0
    %1065 = vmatpush1.msra.mxu0 0.0
    %1066 = vmatprep.subr.mxu0 0.0
    %1067 = vmatpush1.msra.mxu0 0.0
    %1068 = vmatprep.mubr.f32.mxu0 0.0
    %v1069 = vand.u32 %v829, 4294901760
    %v1070 = vsub.f32 %v829, %v1069
    %1071 = vmatmul.mubr.f32.gmra.mrb[0].mxu0 %v1070
    %v1072 = vpop.f32.mrb[0].mxu0
    %v1073 = vadd.f32 %v993, %v1072
    %v1074 = vpop.f32.mrb[0].mxu0
    %1075 = vmatprep.mubr.f32.mxu0 0.0
    %v1076 = vand.u32 %v832, 4294901760
    %v1077 = vsub.f32 %v832, %v1076
    %1078 = vmatmul.mubr.f32.gmra.mrb[0].mxu0 %v1077
    %v1079 = vpop.f32.mrb[0].mxu0
    %v1080 = vadd.f32 %v999, %v1079
    %v1081 = vpop.f32.mrb[0].mxu0
    %1082 = vdwg.mxu0
    %1083 = vmatprep.subr.mxu0 0.0
    %v1084 = vand.u32 %v132, 4294901760
    %1085 = vmatpush1.msra.mxu0 %v1084
    %1086 = vmatprep.subr.mxu0 0.0
    %1087 = vmatpush1.msra.mxu0 0.0
    %1088 = vmatprep.subr.mxu0 0.0
    %1089 = vmatpush1.msra.mxu0 0.0
    %1090 = vmatprep.subr.mxu0 0.0
    %1091 = vmatpush1.msra.mxu0 0.0
    %1092 = vmatprep.subr.mxu0 0.0
    %1093 = vmatpush1.msra.mxu0 0.0
    %1094 = vmatprep.subr.mxu0 0.0
    %1095 = vmatpush1.msra.mxu0 0.0
    %1096 = vmatprep.subr.mxu0 0.0
    %1097 = vmatpush1.msra.mxu0 0.0
    %1098 = vmatprep.subr.mxu0 0.0
    %1099 = vmatpush1.msra.mxu0 0.0
    %1100 = vmatprep.subr.mxu0 0.0
    %1101 = vmatpush1.msra.mxu0 0.0
    %1102 = vmatprep.subr.mxu0 0.0
    %1103 = vmatpush1.msra.mxu0 0.0
    %1104 = vmatprep.subr.mxu0 0.0
    %1105 = vmatpush1.msra.mxu0 0.0
    %1106 = vmatprep.subr.mxu0 0.0
    %1107 = vmatpush1.msra.mxu0 0.0
    %1108 = vmatprep.subr.mxu0 0.0
    %1109 = vmatpush1.msra.mxu0 0.0
    %1110 = vmatprep.subr.mxu0 0.0
    %1111 = vmatpush1.msra.mxu0 0.0
    %1112 = vmatprep.subr.mxu0 0.0
    %1113 = vmatpush1.msra.mxu0 0.0
    %1114 = vmatprep.subr.mxu0 0.0
    %1115 = vmatpush1.msra.mxu0 0.0
    %1116 = vmatprep.subr.mxu0 0.0
    %1117 = vmatpush1.msra.mxu0 0.0
    %1118 = vmatprep.subr.mxu0 0.0
    %1119 = vmatpush1.msra.mxu0 0.0
    %1120 = vmatprep.subr.mxu0 0.0
    %1121 = vmatpush1.msra.mxu0 0.0
    %1122 = vmatprep.subr.mxu0 0.0
    %1123 = vmatpush1.msra.mxu0 0.0
    %1124 = vmatprep.subr.mxu0 0.0
    %1125 = vmatpush1.msra.mxu0 0.0
    %1126 = vmatprep.subr.mxu0 0.0
    %1127 = vmatpush1.msra.mxu0 0.0
    %1128 = vmatprep.subr.mxu0 0.0
    %1129 = vmatpush1.msra.mxu0 0.0
    %1130 = vmatprep.subr.mxu0 0.0
    %1131 = vmatpush1.msra.mxu0 0.0
    %1132 = vmatprep.subr.mxu0 0.0
    %1133 = vmatpush1.msra.mxu0 0.0
    %1134 = vmatprep.subr.mxu0 0.0
    %1135 = vmatpush1.msra.mxu0 0.0
    %1136 = vmatprep.subr.mxu0 0.0
    %1137 = vmatpush1.msra.mxu0 0.0
    %1138 = vmatprep.subr.mxu0 0.0
    %1139 = vmatpush1.msra.mxu0 0.0
    %1140 = vmatprep.subr.mxu0 0.0
    %1141 = vmatpush1.msra.mxu0 0.0
    %1142 = vmatprep.subr.mxu0 0.0
    %1143 = vmatpush1.msra.mxu0 0.0
    %1144 = vmatprep.subr.mxu0 0.0
    %1145 = vmatpush1.msra.mxu0 0.0
    %1146 = vmatprep.subr.mxu0 0.0
    %1147 = vmatpush1.msra.mxu0 0.0
    %1148 = vmatprep.mubr.f32.mxu0 0.0
    %v1149 = vand.u32 %v829, 4294901760
    %v1150 = vsub.f32 %v829, %v1149
    %v1151 = vand.u32 %v1150, 4294901760
    %1152 = vmatmul.mubr.f32.gmra.mrb[0].mxu0 %v1151
    %v1153 = vpop.f32.mrb[0].mxu0
    %v1154 = vadd.f32 %v1073, %v1153
    %v1155 = vpop.f32.mrb[0].mxu0
    %1156 = vmatprep.mubr.f32.mxu0 0.0
    %v1157 = vand.u32 %v832, 4294901760
    %v1158 = vsub.f32 %v832, %v1157
    %v1159 = vand.u32 %v1158, 4294901760
    %1160 = vmatmul.mubr.f32.gmra.mrb[0].mxu0 %v1159
    %v1161 = vpop.f32.mrb[0].mxu0
    %v1162 = vadd.f32 %v1080, %v1161
    %v1163 = vpop.f32.mrb[0].mxu0
    %1164 = vdwg.mxu0
    %1165 = vmatprep.subr.mxu0 0.0
    %v1166 = vand.u32 %v132, 4294901760
    %v1167 = vsub.f32 %v132, %v1166
    %v1168 = vand.u32 %v1167, 4294901760
    %1169 = vmatpush1.msra.mxu0 %v1168
    %1170 = vmatprep.subr.mxu0 0.0
    %1171 = vmatpush1.msra.mxu0 0.0
    %1172 = vmatprep.subr.mxu0 0.0
    %1173 = vmatpush1.msra.mxu0 0.0
    %1174 = vmatprep.subr.mxu0 0.0
    %1175 = vmatpush1.msra.mxu0 0.0
    %1176 = vmatprep.subr.mxu0 0.0
    %1177 = vmatpush1.msra.mxu0 0.0
    %1178 = vmatprep.subr.mxu0 0.0
    %1179 = vmatpush1.msra.mxu0 0.0
    %1180 = vmatprep.subr.mxu0 0.0
    %1181 = vmatpush1.msra.mxu0 0.0
    %1182 = vmatprep.subr.mxu0 0.0
    %1183 = vmatpush1.msra.mxu0 0.0
    %1184 = vmatprep.subr.mxu0 0.0
    %1185 = vmatpush1.msra.mxu0 0.0
    %1186 = vmatprep.subr.mxu0 0.0
    %1187 = vmatpush1.msra.mxu0 0.0
    %1188 = vmatprep.subr.mxu0 0.0
    %1189 = vmatpush1.msra.mxu0 0.0
    %1190 = vmatprep.subr.mxu0 0.0
    %1191 = vmatpush1.msra.mxu0 0.0
    %1192 = vmatprep.subr.mxu0 0.0
    %1193 = vmatpush1.msra.mxu0 0.0
    %1194 = vmatprep.subr.mxu0 0.0
    %1195 = vmatpush1.msra.mxu0 0.0
    %1196 = vmatprep.subr.mxu0 0.0
    %1197 = vmatpush1.msra.mxu0 0.0
    %1198 = vmatprep.subr.mxu0 0.0
    %1199 = vmatpush1.msra.mxu0 0.0
    %1200 = vmatprep.subr.mxu0 0.0
    %1201 = vmatpush1.msra.mxu0 0.0
    %1202 = vmatprep.subr.mxu0 0.0
    %1203 = vmatpush1.msra.mxu0 0.0
    %1204 = vmatprep.subr.mxu0 0.0
    %1205 = vmatpush1.msra.mxu0 0.0
    %1206 = vmatprep.subr.mxu0 0.0
    %1207 = vmatpush1.msra.mxu0 0.0
    %1208 = vmatprep.subr.mxu0 0.0
    %1209 = vmatpush1.msra.mxu0 0.0
    %1210 = vmatprep.subr.mxu0 0.0
    %1211 = vmatpush1.msra.mxu0 0.0
    %1212 = vmatprep.subr.mxu0 0.0
    %1213 = vmatpush1.msra.mxu0 0.0
    %1214 = vmatprep.subr.mxu0 0.0
    %1215 = vmatpush1.msra.mxu0 0.0
    %1216 = vmatprep.subr.mxu0 0.0
    %1217 = vmatpush1.msra.mxu0 0.0
    %1218 = vmatprep.subr.mxu0 0.0
    %1219 = vmatpush1.msra.mxu0 0.0
    %1220 = vmatprep.subr.mxu0 0.0
    %1221 = vmatpush1.msra.mxu0 0.0
    %1222 = vmatprep.subr.mxu0 0.0
    %1223 = vmatpush1.msra.mxu0 0.0
    %1224 = vmatprep.subr.mxu0 0.0
    %1225 = vmatpush1.msra.mxu0 0.0
    %1226 = vmatprep.subr.mxu0 0.0
    %1227 = vmatpush1.msra.mxu0 0.0
    %1228 = vmatprep.subr.mxu0 0.0
    %1229 = vmatpush1.msra.mxu0 0.0
    %1230 = vmatprep.subr.mxu0 0.0
    %1231 = vmatpush1.msra.mxu0 0.0
    %1232 = vmatprep.mubr.f32.mxu0 0.0
    %v1233 = vand.u32 %v829, 4294901760
    %1234 = vmatmul.mubr.f32.gmra.mrb[0].mxu0 %v1233
    %v1235 = vpop.f32.mrb[0].mxu0
    %v1236 = vadd.f32 %v1154, %v1235
    %v1237 = vpop.f32.mrb[0].mxu0
    %1238 = vmatprep.mubr.f32.mxu0 0.0
    %v1239 = vand.u32 %v832, 4294901760
    %1240 = vmatmul.mubr.f32.gmra.mrb[0].mxu0 %v1239
    %v1241 = vpop.f32.mrb[0].mxu0
    %v1242 = vadd.f32 %v1162, %v1241
    %v1243 = vpop.f32.mrb[0].mxu0
    %1244 = vdwg.mxu0
    %1245 = vmatprep.subr.mxu0 0.0
    %v1246 = vand.u32 %v132, 4294901760
    %1247 = vmatpush1.msra.mxu0 %v1246
    %1248 = vmatprep.subr.mxu0 0.0
    %1249 = vmatpush1.msra.mxu0 0.0
    %1250 = vmatprep.subr.mxu0 0.0
    %1251 = vmatpush1.msra.mxu0 0.0
    %1252 = vmatprep.subr.mxu0 0.0
    %1253 = vmatpush1.msra.mxu0 0.0
    %1254 = vmatprep.subr.mxu0 0.0
    %1255 = vmatpush1.msra.mxu0 0.0
    %1256 = vmatprep.subr.mxu0 0.0
    %1257 = vmatpush1.msra.mxu0 0.0
    %1258 = vmatprep.subr.mxu0 0.0
    %1259 = vmatpush1.msra.mxu0 0.0
    %1260 = vmatprep.subr.mxu0 0.0
    %1261 = vmatpush1.msra.mxu0 0.0
    %1262 = vmatprep.subr.mxu0 0.0
    %1263 = vmatpush1.msra.mxu0 0.0
    %1264 = vmatprep.subr.mxu0 0.0
    %1265 = vmatpush1.msra.mxu0 0.0
    %1266 = vmatprep.subr.mxu0 0.0
    %1267 = vmatpush1.msra.mxu0 0.0
    %1268 = vmatprep.subr.mxu0 0.0
    %1269 = vmatpush1.msra.mxu0 0.0
    %1270 = vmatprep.subr.mxu0 0.0
    %1271 = vmatpush1.msra.mxu0 0.0
    %1272 = vmatprep.subr.mxu0 0.0
    %1273 = vmatpush1.msra.mxu0 0.0
    %1274 = vmatprep.subr.mxu0 0.0
    %1275 = vmatpush1.msra.mxu0 0.0
    %1276 = vmatprep.subr.mxu0 0.0
    %1277 = vmatpush1.msra.mxu0 0.0
    %1278 = vmatprep.subr.mxu0 0.0
    %1279 = vmatpush1.msra.mxu0 0.0
    %1280 = vmatprep.subr.mxu0 0.0
    %1281 = vmatpush1.msra.mxu0 0.0
    %1282 = vmatprep.subr.mxu0 0.0
    %1283 = vmatpush1.msra.mxu0 0.0
    %1284 = vmatprep.subr.mxu0 0.0
    %1285 = vmatpush1.msra.mxu0 0.0
    %1286 = vmatprep.subr.mxu0 0.0
    %1287 = vmatpush1.msra.mxu0 0.0
    %1288 = vmatprep.subr.mxu0 0.0
    %1289 = vmatpush1.msra.mxu0 0.0
    %1290 = vmatprep.subr.mxu0 0.0
    %1291 = vmatpush1.msra.mxu0 0.0
    %1292 = vmatprep.subr.mxu0 0.0
    %1293 = vmatpush1.msra.mxu0 0.0
    %1294 = vmatprep.subr.mxu0 0.0
    %1295 = vmatpush1.msra.mxu0 0.0
    %1296 = vmatprep.subr.mxu0 0.0
    %1297 = vmatpush1.msra.mxu0 0.0
    %1298 = vmatprep.subr.mxu0 0.0
    %1299 = vmatpush1.msra.mxu0 0.0
    %1300 = vmatprep.subr.mxu0 0.0
    %1301 = vmatpush1.msra.mxu0 0.0
    %1302 = vmatprep.subr.mxu0 0.0
    %1303 = vmatpush1.msra.mxu0 0.0
    %1304 = vmatprep.subr.mxu0 0.0
    %1305 = vmatpush1.msra.mxu0 0.0
    %1306 = vmatprep.subr.mxu0 0.0
    %1307 = vmatpush1.msra.mxu0 0.0
    %1308 = vmatprep.subr.mxu0 0.0
    %1309 = vmatpush1.msra.mxu0 0.0
    %1310 = vmatprep.mubr.f32.mxu0 0.0
    %v1311 = vand.u32 %v829, 4294901760
    %1312 = vmatmul.mubr.f32.gmra.mrb[0].mxu0 %v1311
    %v1313 = vpop.f32.mrb[0].mxu0
    %v1314 = vadd.f32 %v1236, %v1313
    %v1315 = vpop.f32.mrb[0].mxu0
    %1316 = vmatprep.mubr.f32.mxu0 0.0
    %v1317 = vand.u32 %v832, 4294901760
    %1318 = vmatmul.mubr.f32.gmra.mrb[0].mxu0 %v1317
    %v1319 = vpop.f32.mrb[0].mxu0
    %v1320 = vadd.f32 %v1242, %v1319
    %v1321 = vpop.f32.mrb[0].mxu0
    %1322 = vdwg.mxu0
    %v1323 = vmul.f32 %v133, %v1314
    %v1324 = vmul.f32 %v134, %v1320
    %1325 = vst [vmem:[#allocation5] sm:$0xff] %v1323
    %1326 = vst [vmem:[#allocation5 + $0x8] sm:$0xff] %v1324
    // Predicated region
    $region10: #{tpu_custom_call.1} parent=1 // pred_check
      _
    $region11: #{tpu_custom_call.1} parent=1 // pred_check_branch
      %1328 = sbr.rel (0) target = $region13
    $region12: #{tpu_custom_call.1} parent=1 // pred_region
      %s1330 = ssub.s32 256, 256
      %1331 = vsyncadd [#allocation4], %s1330
      %s1332 = sshll.u32 [#allocation5], 4
      %s1333 = int_to_ptr.vmem [resolvable:$true] %s1332
      %1338 = dma.vmem_to_hbm [thread:$0]  %s1333, 256, %s1, [#allocation4], 128, 128, 8
    $region13: #{tpu_custom_call.1} parent=1 // pred_fallthru
      _
    // Predicated region
    $region14: #{tpu_custom_call.1} parent=1 // pred_check
      _
    $region15: #{tpu_custom_call.1} parent=1 // pred_check_branch
      %1340 = sbr.rel (0) target = $region17
    $region16: #{tpu_custom_call.1} parent=1 // pred_region
      %1341 = dma.done [#allocation4], 256
    $region17: #{tpu_custom_call.1} parent=1 // pred_fallthru
      _
    %1342 = vsyncpa [#allocation3], 1
    %1343 = vsyncpa [#allocation4], 1

</llo_original>
